<compile_context>
chip_gen: v7x
topology: tpu7x:2x2x1
jax: 0.10.0
libtpu: 0.0.40
codegen_flags: <defaults>
</compile_context>

<pallas_src>
import functools

import jax
import jax.numpy as jnp
from jax.experimental import pallas as pl
from jax.experimental.pallas import tpu as pltpu

SIGMA = 1e-4                      # BlendParams default in Renderer.__init__
BACKGROUND = (0.0, 0.0, 0.0)      # BlendParams default background_color
AMBIENT = (1.0, 1.0, 1.0)         # AmbientLights default -> colors untouched
CLIP_INSIDE = True
FACES_PER_PIXEL = 8               # small K for the demo (module default is 25)

LANE = 128                        # lane-dense spatial packing width
LARGE = 1e30                      # sentinel for masked fragments -> alpha == 0


def _round_up(x, m):
    return ((x + m - 1) // m) * m


def _layered_blend_kernel(colors_ref, dists_ref, out_ref, *,
                          sigma, background, ambient, clip_inside):
    """Soft layered alpha compositing over K fragments for one spatial tile.

    colors_ref : (1, K, 3, TR, LANE)  bf16   sampled texture colors
    dists_ref  : (1, K, TR, LANE)     f32    signed dists; masked slots = +LARGE
    out_ref    : (1, 4, TR, LANE)     f32    channels = R, G, B, A
    """
    K = dists_ref.shape[1]
    TR, L = dists_ref.shape[2], dists_ref.shape[3]

    inv_sigma = (1.0 / sigma) if sigma != 0.0 else 0.0

    occ = jnp.ones((TR, L), jnp.float32)                       # cumprod(1 - alpha)
    rgb = [jnp.zeros((TR, L), jnp.float32) for _ in range(3)]  # composited color

    # K is small and static -> unrolled front-to-back compositing (VPU + EUP).
    for k in range(K):
        d = dists_ref[0, k]
        if sigma == 0.0:
            alpha = (d <= 0.0).astype(jnp.float32)
        elif clip_inside:
            alpha = jnp.exp(-jnp.maximum(d, 0.0) * inv_sigma)
        else:
            alpha = jax.nn.sigmoid(-d * inv_sigma)
        w = occ * alpha
        for c in range(3):
            col = colors_ref[0, k, c].astype(jnp.float32)
            if float(ambient[c]) != 1.0:        # raw shading * ambient (no-op by default)
                col = col * float(ambient[c])
            rgb[c] = rgb[c] + w * col
        occ = occ * (1.0 - alpha)

    # Background layer (alpha = 1) + direct per-channel stores (no concat temp).
    for c in range(3):
        v = rgb[c]
        if float(background[c]) != 0.0:
            v = v + occ * float(background[c])
        out_ref[0, c] = v
    out_ref[0, 3] = 1.0 - occ


def layered_rgb_blend_pallas(colors, pix_to_face, dists,
                             sigma=SIGMA, background=BACKGROUND,
                             ambient=AMBIENT, clip_inside=CLIP_INSIDE):
    """colors: (N,H,W,K,3); pix_to_face, dists: (N,H,W,K). Returns (N,4,H,W) f32."""
    N, H, W, K, _ = colors.shape
    S = H * W

    # Lane-dense spatial packing: flatten (H,W) -> S, view as (rows, 128).
    R = pl.cdiv(S, LANE)
    TR = 128 if R >= 128 else _round_up(R, 16)   # 16: bf16 sublane tile
    R_pad = _round_up(R, TR)
    S_pad = R_pad * LANE

    # Glue pass (fused elementwise + transpose per tensor):
    #  * fold pix_to_face>=0 into dists (+LARGE => alpha==0) so the int32
    #    pix_to_face tensor never reaches the kernel (~18% fewer HBM bytes)
    #  * colors carried as bf16 (halves the dominant input stream)
    # TODO(synk): the rasterizer/texture sampler should emit fragments directly
    # in this (N,K,3,rows,128) layout to avoid the extra HBM pass of the transpose.
    dists_m = jnp.where(pix_to_face >= 0, dists.astype(jnp.float32),
                        jnp.float32(LARGE))
    dists_k = jnp.transpose(dists_m.reshape(N, S, K), (0, 2, 1))
    dists_k = jnp.pad(dists_k, ((0, 0), (0, 0), (0, S_pad - S)),
                      constant_values=LARGE)
    dists_k = dists_k.reshape(N, K, R_pad, LANE)

    colors_k = jnp.transpose(colors.reshape(N, S, K, 3), (0, 2, 3, 1))
    colors_k = colors_k.astype(jnp.bfloat16)
    colors_k = jnp.pad(colors_k, ((0, 0), (0, 0), (0, 0), (0, S_pad - S)))
    colors_k = colors_k.reshape(N, K, 3, R_pad, LANE)

    kernel = functools.partial(
        _layered_blend_kernel,
        sigma=float(sigma),
        background=tuple(float(b) for b in background),
        ambient=tuple(float(a) for a in ambient),
        clip_inside=bool(clip_inside))

    out = pl.pallas_call(
        kernel,
        out_shape=jax.ShapeDtypeStruct((N, 4, R_pad, LANE), jnp.float32),
        grid=(N, R_pad // TR),
        in_specs=[
            pl.BlockSpec((1, K, 3, TR, LANE), lambda n, r: (n, 0, 0, r, 0)),
            pl.BlockSpec((1, K, TR, LANE), lambda n, r: (n, 0, r, 0)),
        ],
        out_specs=pl.BlockSpec((1, 4, TR, LANE), lambda n, r: (n, 0, r, 0)),
        compiler_params=pltpu.CompilerParams(
            dimension_semantics=("parallel", "parallel"),
            vmem_limit_bytes=32 * 1024 * 1024),
    )(colors_k, dists_k)

    # Trim padding; result equals pixel_colors.permute(0, 3, 1, 2).
    return out.reshape(N, 4, S_pad)[:, :, :S].reshape(N, 4, H, W)


# -------- pure-JAX reference (mirrors torch layered_rgb_blend exactly) --------
def layered_rgb_blend_ref(colors, pix_to_face, dists,
                          sigma=SIGMA, background=BACKGROUND, clip_inside=CLIP_INSIDE):
    N, H, W, K, _ = colors.shape
    mask = (pix_to_face >= 0).astype(jnp.float32)
    if sigma == 0:
        alpha = (dists <= 0).astype(jnp.float32) * mask
    elif clip_inside:
        alpha = jnp.exp(-jnp.clip(dists, 0.0, None) / sigma) * mask
    else:
        alpha = jax.nn.sigmoid(-dists / sigma) * mask
    occ = jnp.cumprod(1.0 - alpha, axis=-1)
    occ = jnp.concatenate([jnp.ones((N, H, W, 1), jnp.float32), occ], axis=-1)
    bg = jnp.asarray(background, jnp.float32)
    colors_ext = jnp.concatenate(
        [colors, jnp.broadcast_to(bg, (N, H, W, 1, 3))], axis=-2)
    alpha_ext = jnp.concatenate([alpha, jnp.ones((N, H, W, 1), jnp.float32)], axis=-1)
    rgb = (occ[..., None] * alpha_ext[..., None] * colors_ext).sum(-2)
    a = 1.0 - occ[..., -1]
    pix = jnp.concatenate([rgb, a[..., None]], axis=-1)         # (N,H,W,4)
    return jnp.transpose(pix, (0, 3, 1, 2))                     # (N,4,H,W)


if __name__ == "__main__":
    # TODO(synk): the MeshRasterizer (pix_to_face/dists/bary), texture sampling,
    # and the 4x-supersampled avg_pool path have no clean Pallas equivalent;
    # synthetic fragments stand in for the rasterizer output here.
    N, H, W, K = 2, 16, 16, FACES_PER_PIXEL
    key = jax.random.PRNGKey(0)
    k1, k2, k3 = jax.random.split(key, 3)

    # Sampled texture colors per fragment (raw shading).
    colors = jax.random.uniform(k1, (N, H, W, K, 3), dtype=jnp.float32)
    # Signed squared distances to face edges, on the scale of sigma.
    dists = jax.random.normal(k2, (N, H, W, K), dtype=jnp.float32) * 2e-4
    # pix_to_face: valid face index or -1 (empty fragment slot).
    pix_to_face = jax.random.randint(k3, (N, H, W, K), -1, 12, dtype=jnp.int32)

    out = layered_rgb_blend_pallas(colors, pix_to_face, dists)
    out = jax.block_until_ready(out)

    # Reference fed the same bf16-quantized colors the kernel consumes, so the
    # comparison isolates the kernel math (all done in f32).
    colors_q = colors.astype(jnp.bfloat16).astype(jnp.float32)
    ref = layered_rgb_blend_ref(colors_q, pix_to_face, dists)

    assert out.shape == (N, 4, H, W) and out.dtype == jnp.float32
    assert jnp.allclose(out, ref, rtol=1e-5, atol=1e-5), \
        float(jnp.max(jnp.abs(out - ref)))

    print("KERNEL_OK")
</pallas_src>

<mosaic_0001>
module attributes {stable_mosaic.version = 11 : i64} {
  func.func @_layered_blend_kernel(%arg0: i32, %arg1: i32, %arg2: memref<1x8x3x16x128xbf16, #tpu.memory_space<vmem>>, %arg3: memref<1x8x16x128xf32, #tpu.memory_space<vmem>>, %arg4: memref<1x4x16x128xf32, #tpu.memory_space<vmem>>) attributes {dimension_semantics = [#tpu.dimension_semantics<parallel>, #tpu.dimension_semantics<parallel>], iteration_bounds = array<i64: 2, 1>, scalar_prefetch = 0 : i64, scratch_operands = 0 : i64, tpu.core_type = #tpu.core_type<tc>, window_params = [{transform_indices = @transform_0, window_bounds = array<i64: 1, 8, 3, 16, 128>}, {transform_indices = @transform_1, window_bounds = array<i64: 1, 8, 16, 128>}, {transform_indices = @transform_2, window_bounds = array<i64: 1, 4, 16, 128>}]} {
    %cst = arith.constant 1.000000e+00 : f32
    %0 = vector.broadcast %cst : f32 to vector<16x128xf32>
    %cst_0 = arith.constant 0.000000e+00 : f32
    %1 = vector.broadcast %cst_0 : f32 to vector<16x128xf32>
    %cst_1 = arith.constant 0.000000e+00 : f32
    %2 = vector.broadcast %cst_1 : f32 to vector<16x128xf32>
    %cst_2 = arith.constant 0.000000e+00 : f32
    %3 = vector.broadcast %cst_2 : f32 to vector<16x128xf32>
    %c0 = arith.constant 0 : index
    %c0_3 = arith.constant 0 : index
    %c0_4 = arith.constant 0 : index
    %c0_5 = arith.constant 0 : index
    %4 = vector.load %arg3[%c0, %c0_3, %c0_4, %c0_5] : memref<1x8x16x128xf32, #tpu.memory_space<vmem>>, vector<1x1x16x128xf32>
    %5 = vector.shape_cast %4 : vector<1x1x16x128xf32> to vector<16x128xf32>
    %cst_6 = arith.constant 0.000000e+00 : f32
    %6 = vector.broadcast %cst_6 : f32 to vector<16x128xf32>
    %7 = arith.maximumf %5, %6 : vector<16x128xf32>
    %cst_7 = arith.constant 0.000000e+00 : f32
    %8 = vector.broadcast %cst_7 : f32 to vector<16x128xf32>
    %9 = arith.subf %8, %7 : vector<16x128xf32>
    %cst_8 = arith.constant 1.000000e+04 : f32
    %10 = vector.broadcast %cst_8 : f32 to vector<16x128xf32>
    %11 = arith.mulf %9, %10 : vector<16x128xf32>
    %12 = math.exp %11 : vector<16x128xf32>
    %13 = arith.mulf %0, %12 : vector<16x128xf32>
    %c0_9 = arith.constant 0 : index
    %c0_10 = arith.constant 0 : index
    %c0_11 = arith.constant 0 : index
    %c0_12 = arith.constant 0 : index
    %c0_13 = arith.constant 0 : index
    %14 = vector.load %arg2[%c0_9, %c0_10, %c0_11, %c0_12, %c0_13] : memref<1x8x3x16x128xbf16, #tpu.memory_space<vmem>>, vector<1x1x1x16x128xbf16>
    %15 = vector.shape_cast %14 : vector<1x1x1x16x128xbf16> to vector<16x128xbf16>
    %16 = arith.extf %15 : vector<16x128xbf16> to vector<16x128xf32>
    %17 = arith.mulf %13, %16 : vector<16x128xf32>
    %18 = arith.addf %1, %17 : vector<16x128xf32>
    %c0_14 = arith.constant 0 : index
    %c0_15 = arith.constant 0 : index
    %c1 = arith.constant 1 : index
    %c0_16 = arith.constant 0 : index
    %c0_17 = arith.constant 0 : index
    %19 = vector.load %arg2[%c0_14, %c0_15, %c1, %c0_16, %c0_17] : memref<1x8x3x16x128xbf16, #tpu.memory_space<vmem>>, vector<1x1x1x16x128xbf16>
    %20 = vector.shape_cast %19 : vector<1x1x1x16x128xbf16> to vector<16x128xbf16>
    %21 = arith.extf %20 : vector<16x128xbf16> to vector<16x128xf32>
    %22 = arith.mulf %13, %21 : vector<16x128xf32>
    %23 = arith.addf %2, %22 : vector<16x128xf32>
    %c0_18 = arith.constant 0 : index
    %c0_19 = arith.constant 0 : index
    %c2 = arith.constant 2 : index
    %c0_20 = arith.constant 0 : index
    %c0_21 = arith.constant 0 : index
    %24 = vector.load %arg2[%c0_18, %c0_19, %c2, %c0_20, %c0_21] : memref<1x8x3x16x128xbf16, #tpu.memory_space<vmem>>, vector<1x1x1x16x128xbf16>
    %25 = vector.shape_cast %24 : vector<1x1x1x16x128xbf16> to vector<16x128xbf16>
    %26 = arith.extf %25 : vector<16x128xbf16> to vector<16x128xf32>
    %27 = arith.mulf %13, %26 : vector<16x128xf32>
    %28 = arith.addf %3, %27 : vector<16x128xf32>
    %cst_22 = arith.constant 1.000000e+00 : f32
    %29 = vector.broadcast %cst_22 : f32 to vector<16x128xf32>
    %30 = arith.subf %29, %12 : vector<16x128xf32>
    %31 = arith.mulf %0, %30 : vector<16x128xf32>
    %c0_23 = arith.constant 0 : index
    %c1_24 = arith.constant 1 : index
    %c0_25 = arith.constant 0 : index
    %c0_26 = arith.constant 0 : index
    %32 = vector.load %arg3[%c0_23, %c1_24, %c0_25, %c0_26] : memref<1x8x16x128xf32, #tpu.memory_space<vmem>>, vector<1x1x16x128xf32>
    %33 = vector.shape_cast %32 : vector<1x1x16x128xf32> to vector<16x128xf32>
    %cst_27 = arith.constant 0.000000e+00 : f32
    %34 = vector.broadcast %cst_27 : f32 to vector<16x128xf32>
    %35 = arith.maximumf %33, %34 : vector<16x128xf32>
    %cst_28 = arith.constant 0.000000e+00 : f32
    %36 = vector.broadcast %cst_28 : f32 to vector<16x128xf32>
    %37 = arith.subf %36, %35 : vector<16x128xf32>
    %cst_29 = arith.constant 1.000000e+04 : f32
    %38 = vector.broadcast %cst_29 : f32 to vector<16x128xf32>
    %39 = arith.mulf %37, %38 : vector<16x128xf32>
    %40 = math.exp %39 : vector<16x128xf32>
    %41 = arith.mulf %31, %40 : vector<16x128xf32>
    %c0_30 = arith.constant 0 : index
    %c1_31 = arith.constant 1 : index
    %c0_32 = arith.constant 0 : index
    %c0_33 = arith.constant 0 : index
    %c0_34 = arith.constant 0 : index
    %42 = vector.load %arg2[%c0_30, %c1_31, %c0_32, %c0_33, %c0_34] : memref<1x8x3x16x128xbf16, #tpu.memory_space<vmem>>, vector<1x1x1x16x128xbf16>
    %43 = vector.shape_cast %42 : vector<1x1x1x16x128xbf16> to vector<16x128xbf16>
    %44 = arith.extf %43 : vector<16x128xbf16> to vector<16x128xf32>
    %45 = arith.mulf %41, %44 : vector<16x128xf32>
    %46 = arith.addf %18, %45 : vector<16x128xf32>
    %c0_35 = arith.constant 0 : index
    %c1_36 = arith.constant 1 : index
    %c1_37 = arith.constant 1 : index
    %c0_38 = arith.constant 0 : index
    %c0_39 = arith.constant 0 : index
    %47 = vector.load %arg2[%c0_35, %c1_36, %c1_37, %c0_38, %c0_39] : memref<1x8x3x16x128xbf16, #tpu.memory_space<vmem>>, vector<1x1x1x16x128xbf16>
    %48 = vector.shape_cast %47 : vector<1x1x1x16x128xbf16> to vector<16x128xbf16>
    %49 = arith.extf %48 : vector<16x128xbf16> to vector<16x128xf32>
    %50 = arith.mulf %41, %49 : vector<16x128xf32>
    %51 = arith.addf %23, %50 : vector<16x128xf32>
    %c0_40 = arith.constant 0 : index
    %c1_41 = arith.constant 1 : index
    %c2_42 = arith.constant 2 : index
    %c0_43 = arith.constant 0 : index
    %c0_44 = arith.constant 0 : index
    %52 = vector.load %arg2[%c0_40, %c1_41, %c2_42, %c0_43, %c0_44] : memref<1x8x3x16x128xbf16, #tpu.memory_space<vmem>>, vector<1x1x1x16x128xbf16>
    %53 = vector.shape_cast %52 : vector<1x1x1x16x128xbf16> to vector<16x128xbf16>
    %54 = arith.extf %53 : vector<16x128xbf16> to vector<16x128xf32>
    %55 = arith.mulf %41, %54 : vector<16x128xf32>
    %56 = arith.addf %28, %55 : vector<16x128xf32>
    %cst_45 = arith.constant 1.000000e+00 : f32
    %57 = vector.broadcast %cst_45 : f32 to vector<16x128xf32>
    %58 = arith.subf %57, %40 : vector<16x128xf32>
    %59 = arith.mulf %31, %58 : vector<16x128xf32>
    %c0_46 = arith.constant 0 : index
    %c2_47 = arith.constant 2 : index
    %c0_48 = arith.constant 0 : index
    %c0_49 = arith.constant 0 : index
    %60 = vector.load %arg3[%c0_46, %c2_47, %c0_48, %c0_49] : memref<1x8x16x128xf32, #tpu.memory_space<vmem>>, vector<1x1x16x128xf32>
    %61 = vector.shape_cast %60 : vector<1x1x16x128xf32> to vector<16x128xf32>
    %cst_50 = arith.constant 0.000000e+00 : f32
    %62 = vector.broadcast %cst_50 : f32 to vector<16x128xf32>
    %63 = arith.maximumf %61, %62 : vector<16x128xf32>
    %cst_51 = arith.constant 0.000000e+00 : f32
    %64 = vector.broadcast %cst_51 : f32 to vector<16x128xf32>
    %65 = arith.subf %64, %63 : vector<16x128xf32>
    %cst_52 = arith.constant 1.000000e+04 : f32
    %66 = vector.broadcast %cst_52 : f32 to vector<16x128xf32>
    %67 = arith.mulf %65, %66 : vector<16x128xf32>
    %68 = math.exp %67 : vector<16x128xf32>
    %69 = arith.mulf %59, %68 : vector<16x128xf32>
    %c0_53 = arith.constant 0 : index
    %c2_54 = arith.constant 2 : index
    %c0_55 = arith.constant 0 : index
    %c0_56 = arith.constant 0 : index
    %c0_57 = arith.constant 0 : index
    %70 = vector.load %arg2[%c0_53, %c2_54, %c0_55, %c0_56, %c0_57] : memref<1x8x3x16x128xbf16, #tpu.memory_space<vmem>>, vector<1x1x1x16x128xbf16>
    %71 = vector.shape_cast %70 : vector<1x1x1x16x128xbf16> to vector<16x128xbf16>
    %72 = arith.extf %71 : vector<16x128xbf16> to vector<16x128xf32>
    %73 = arith.mulf %69, %72 : vector<16x128xf32>
    %74 = arith.addf %46, %73 : vector<16x128xf32>
    %c0_58 = arith.constant 0 : index
    %c2_59 = arith.constant 2 : index
    %c1_60 = arith.constant 1 : index
    %c0_61 = arith.constant 0 : index
    %c0_62 = arith.constant 0 : index
    %75 = vector.load %arg2[%c0_58, %c2_59, %c1_60, %c0_61, %c0_62] : memref<1x8x3x16x128xbf16, #tpu.memory_space<vmem>>, vector<1x1x1x16x128xbf16>
    %76 = vector.shape_cast %75 : vector<1x1x1x16x128xbf16> to vector<16x128xbf16>
    %77 = arith.extf %76 : vector<16x128xbf16> to vector<16x128xf32>
    %78 = arith.mulf %69, %77 : vector<16x128xf32>
    %79 = arith.addf %51, %78 : vector<16x128xf32>
    %c0_63 = arith.constant 0 : index
    %c2_64 = arith.constant 2 : index
    %c2_65 = arith.constant 2 : index
    %c0_66 = arith.constant 0 : index
    %c0_67 = arith.constant 0 : index
    %80 = vector.load %arg2[%c0_63, %c2_64, %c2_65, %c0_66, %c0_67] : memref<1x8x3x16x128xbf16, #tpu.memory_space<vmem>>, vector<1x1x1x16x128xbf16>
    %81 = vector.shape_cast %80 : vector<1x1x1x16x128xbf16> to vector<16x128xbf16>
    %82 = arith.extf %81 : vector<16x128xbf16> to vector<16x128xf32>
    %83 = arith.mulf %69, %82 : vector<16x128xf32>
    %84 = arith.addf %56, %83 : vector<16x128xf32>
    %cst_68 = arith.constant 1.000000e+00 : f32
    %85 = vector.broadcast %cst_68 : f32 to vector<16x128xf32>
    %86 = arith.subf %85, %68 : vector<16x128xf32>
    %87 = arith.mulf %59, %86 : vector<16x128xf32>
    %c0_69 = arith.constant 0 : index
    %c3 = arith.constant 3 : index
    %c0_70 = arith.constant 0 : index
    %c0_71 = arith.constant 0 : index
    %88 = vector.load %arg3[%c0_69, %c3, %c0_70, %c0_71] : memref<1x8x16x128xf32, #tpu.memory_space<vmem>>, vector<1x1x16x128xf32>
    %89 = vector.shape_cast %88 : vector<1x1x16x128xf32> to vector<16x128xf32>
    %cst_72 = arith.constant 0.000000e+00 : f32
    %90 = vector.broadcast %cst_72 : f32 to vector<16x128xf32>
    %91 = arith.maximumf %89, %90 : vector<16x128xf32>
    %cst_73 = arith.constant 0.000000e+00 : f32
    %92 = vector.broadcast %cst_73 : f32 to vector<16x128xf32>
    %93 = arith.subf %92, %91 : vector<16x128xf32>
    %cst_74 = arith.constant 1.000000e+04 : f32
    %94 = vector.broadcast %cst_74 : f32 to vector<16x128xf32>
    %95 = arith.mulf %93, %94 : vector<16x128xf32>
    %96 = math.exp %95 : vector<16x128xf32>
    %97 = arith.mulf %87, %96 : vector<16x128xf32>
    %c0_75 = arith.constant 0 : index
    %c3_76 = arith.constant 3 : index
    %c0_77 = arith.constant 0 : index
    %c0_78 = arith.constant 0 : index
    %c0_79 = arith.constant 0 : index
    %98 = vector.load %arg2[%c0_75, %c3_76, %c0_77, %c0_78, %c0_79] : memref<1x8x3x16x128xbf16, #tpu.memory_space<vmem>>, vector<1x1x1x16x128xbf16>
    %99 = vector.shape_cast %98 : vector<1x1x1x16x128xbf16> to vector<16x128xbf16>
    %100 = arith.extf %99 : vector<16x128xbf16> to vector<16x128xf32>
    %101 = arith.mulf %97, %100 : vector<16x128xf32>
    %102 = arith.addf %74, %101 : vector<16x128xf32>
    %c0_80 = arith.constant 0 : index
    %c3_81 = arith.constant 3 : index
    %c1_82 = arith.constant 1 : index
    %c0_83 = arith.constant 0 : index
    %c0_84 = arith.constant 0 : index
    %103 = vector.load %arg2[%c0_80, %c3_81, %c1_82, %c0_83, %c0_84] : memref<1x8x3x16x128xbf16, #tpu.memory_space<vmem>>, vector<1x1x1x16x128xbf16>
    %104 = vector.shape_cast %103 : vector<1x1x1x16x128xbf16> to vector<16x128xbf16>
    %105 = arith.extf %104 : vector<16x128xbf16> to vector<16x128xf32>
    %106 = arith.mulf %97, %105 : vector<16x128xf32>
    %107 = arith.addf %79, %106 : vector<16x128xf32>
    %c0_85 = arith.constant 0 : index
    %c3_86 = arith.constant 3 : index
    %c2_87 = arith.constant 2 : index
    %c0_88 = arith.constant 0 : index
    %c0_89 = arith.constant 0 : index
    %108 = vector.load %arg2[%c0_85, %c3_86, %c2_87, %c0_88, %c0_89] : memref<1x8x3x16x128xbf16, #tpu.memory_space<vmem>>, vector<1x1x1x16x128xbf16>
    %109 = vector.shape_cast %108 : vector<1x1x1x16x128xbf16> to vector<16x128xbf16>
    %110 = arith.extf %109 : vector<16x128xbf16> to vector<16x128xf32>
    %111 = arith.mulf %97, %110 : vector<16x128xf32>
    %112 = arith.addf %84, %111 : vector<16x128xf32>
    %cst_90 = arith.constant 1.000000e+00 : f32
    %113 = vector.broadcast %cst_90 : f32 to vector<16x128xf32>
    %114 = arith.subf %113, %96 : vector<16x128xf32>
    %115 = arith.mulf %87, %114 : vector<16x128xf32>
    %c0_91 = arith.constant 0 : index
    %c4 = arith.constant 4 : index
    %c0_92 = arith.constant 0 : index
    %c0_93 = arith.constant 0 : index
    %116 = vector.load %arg3[%c0_91, %c4, %c0_92, %c0_93] : memref<1x8x16x128xf32, #tpu.memory_space<vmem>>, vector<1x1x16x128xf32>
    %117 = vector.shape_cast %116 : vector<1x1x16x128xf32> to vector<16x128xf32>
    %cst_94 = arith.constant 0.000000e+00 : f32
    %118 = vector.broadcast %cst_94 : f32 to vector<16x128xf32>
    %119 = arith.maximumf %117, %118 : vector<16x128xf32>
    %cst_95 = arith.constant 0.000000e+00 : f32
    %120 = vector.broadcast %cst_95 : f32 to vector<16x128xf32>
    %121 = arith.subf %120, %119 : vector<16x128xf32>
    %cst_96 = arith.constant 1.000000e+04 : f32
    %122 = vector.broadcast %cst_96 : f32 to vector<16x128xf32>
    %123 = arith.mulf %121, %122 : vector<16x128xf32>
    %124 = math.exp %123 : vector<16x128xf32>
    %125 = arith.mulf %115, %124 : vector<16x128xf32>
    %c0_97 = arith.constant 0 : index
    %c4_98 = arith.constant 4 : index
    %c0_99 = arith.constant 0 : index
    %c0_100 = arith.constant 0 : index
    %c0_101 = arith.constant 0 : index
    %126 = vector.load %arg2[%c0_97, %c4_98, %c0_99, %c0_100, %c0_101] : memref<1x8x3x16x128xbf16, #tpu.memory_space<vmem>>, vector<1x1x1x16x128xbf16>
    %127 = vector.shape_cast %126 : vector<1x1x1x16x128xbf16> to vector<16x128xbf16>
    %128 = arith.extf %127 : vector<16x128xbf16> to vector<16x128xf32>
    %129 = arith.mulf %125, %128 : vector<16x128xf32>
    %130 = arith.addf %102, %129 : vector<16x128xf32>
    %c0_102 = arith.constant 0 : index
    %c4_103 = arith.constant 4 : index
    %c1_104 = arith.constant 1 : index
    %c0_105 = arith.constant 0 : index
    %c0_106 = arith.constant 0 : index
    %131 = vector.load %arg2[%c0_102, %c4_103, %c1_104, %c0_105, %c0_106] : memref<1x8x3x16x128xbf16, #tpu.memory_space<vmem>>, vector<1x1x1x16x128xbf16>
    %132 = vector.shape_cast %131 : vector<1x1x1x16x128xbf16> to vector<16x128xbf16>
    %133 = arith.extf %132 : vector<16x128xbf16> to vector<16x128xf32>
    %134 = arith.mulf %125, %133 : vector<16x128xf32>
    %135 = arith.addf %107, %134 : vector<16x128xf32>
    %c0_107 = arith.constant 0 : index
    %c4_108 = arith.constant 4 : index
    %c2_109 = arith.constant 2 : index
    %c0_110 = arith.constant 0 : index
    %c0_111 = arith.constant 0 : index
    %136 = vector.load %arg2[%c0_107, %c4_108, %c2_109, %c0_110, %c0_111] : memref<1x8x3x16x128xbf16, #tpu.memory_space<vmem>>, vector<1x1x1x16x128xbf16>
    %137 = vector.shape_cast %136 : vector<1x1x1x16x128xbf16> to vector<16x128xbf16>
    %138 = arith.extf %137 : vector<16x128xbf16> to vector<16x128xf32>
    %139 = arith.mulf %125, %138 : vector<16x128xf32>
    %140 = arith.addf %112, %139 : vector<16x128xf32>
    %cst_112 = arith.constant 1.000000e+00 : f32
    %141 = vector.broadcast %cst_112 : f32 to vector<16x128xf32>
    %142 = arith.subf %141, %124 : vector<16x128xf32>
    %143 = arith.mulf %115, %142 : vector<16x128xf32>
    %c0_113 = arith.constant 0 : index
    %c5 = arith.constant 5 : index
    %c0_114 = arith.constant 0 : index
    %c0_115 = arith.constant 0 : index
    %144 = vector.load %arg3[%c0_113, %c5, %c0_114, %c0_115] : memref<1x8x16x128xf32, #tpu.memory_space<vmem>>, vector<1x1x16x128xf32>
    %145 = vector.shape_cast %144 : vector<1x1x16x128xf32> to vector<16x128xf32>
    %cst_116 = arith.constant 0.000000e+00 : f32
    %146 = vector.broadcast %cst_116 : f32 to vector<16x128xf32>
    %147 = arith.maximumf %145, %146 : vector<16x128xf32>
    %cst_117 = arith.constant 0.000000e+00 : f32
    %148 = vector.broadcast %cst_117 : f32 to vector<16x128xf32>
    %149 = arith.subf %148, %147 : vector<16x128xf32>
    %cst_118 = arith.constant 1.000000e+04 : f32
    %150 = vector.broadcast %cst_118 : f32 to vector<16x128xf32>
    %151 = arith.mulf %149, %150 : vector<16x128xf32>
    %152 = math.exp %151 : vector<16x128xf32>
    %153 = arith.mulf %143, %152 : vector<16x128xf32>
    %c0_119 = arith.constant 0 : index
    %c5_120 = arith.constant 5 : index
    %c0_121 = arith.constant 0 : index
    %c0_122 = arith.constant 0 : index
    %c0_123 = arith.constant 0 : index
    %154 = vector.load %arg2[%c0_119, %c5_120, %c0_121, %c0_122, %c0_123] : memref<1x8x3x16x128xbf16, #tpu.memory_space<vmem>>, vector<1x1x1x16x128xbf16>
    %155 = vector.shape_cast %154 : vector<1x1x1x16x128xbf16> to vector<16x128xbf16>
    %156 = arith.extf %155 : vector<16x128xbf16> to vector<16x128xf32>
    %157 = arith.mulf %153, %156 : vector<16x128xf32>
    %158 = arith.addf %130, %157 : vector<16x128xf32>
    %c0_124 = arith.constant 0 : index
    %c5_125 = arith.constant 5 : index
    %c1_126 = arith.constant 1 : index
    %c0_127 = arith.constant 0 : index
    %c0_128 = arith.constant 0 : index
    %159 = vector.load %arg2[%c0_124, %c5_125, %c1_126, %c0_127, %c0_128] : memref<1x8x3x16x128xbf16, #tpu.memory_space<vmem>>, vector<1x1x1x16x128xbf16>
    %160 = vector.shape_cast %159 : vector<1x1x1x16x128xbf16> to vector<16x128xbf16>
    %161 = arith.extf %160 : vector<16x128xbf16> to vector<16x128xf32>
    %162 = arith.mulf %153, %161 : vector<16x128xf32>
    %163 = arith.addf %135, %162 : vector<16x128xf32>
    %c0_129 = arith.constant 0 : index
    %c5_130 = arith.constant 5 : index
    %c2_131 = arith.constant 2 : index
    %c0_132 = arith.constant 0 : index
    %c0_133 = arith.constant 0 : index
    %164 = vector.load %arg2[%c0_129, %c5_130, %c2_131, %c0_132, %c0_133] : memref<1x8x3x16x128xbf16, #tpu.memory_space<vmem>>, vector<1x1x1x16x128xbf16>
    %165 = vector.shape_cast %164 : vector<1x1x1x16x128xbf16> to vector<16x128xbf16>
    %166 = arith.extf %165 : vector<16x128xbf16> to vector<16x128xf32>
    %167 = arith.mulf %153, %166 : vector<16x128xf32>
    %168 = arith.addf %140, %167 : vector<16x128xf32>
    %cst_134 = arith.constant 1.000000e+00 : f32
    %169 = vector.broadcast %cst_134 : f32 to vector<16x128xf32>
    %170 = arith.subf %169, %152 : vector<16x128xf32>
    %171 = arith.mulf %143, %170 : vector<16x128xf32>
    %c0_135 = arith.constant 0 : index
    %c6 = arith.constant 6 : index
    %c0_136 = arith.constant 0 : index
    %c0_137 = arith.constant 0 : index
    %172 = vector.load %arg3[%c0_135, %c6, %c0_136, %c0_137] : memref<1x8x16x128xf32, #tpu.memory_space<vmem>>, vector<1x1x16x128xf32>
    %173 = vector.shape_cast %172 : vector<1x1x16x128xf32> to vector<16x128xf32>
    %cst_138 = arith.constant 0.000000e+00 : f32
    %174 = vector.broadcast %cst_138 : f32 to vector<16x128xf32>
    %175 = arith.maximumf %173, %174 : vector<16x128xf32>
    %cst_139 = arith.constant 0.000000e+00 : f32
    %176 = vector.broadcast %cst_139 : f32 to vector<16x128xf32>
    %177 = arith.subf %176, %175 : vector<16x128xf32>
    %cst_140 = arith.constant 1.000000e+04 : f32
    %178 = vector.broadcast %cst_140 : f32 to vector<16x128xf32>
    %179 = arith.mulf %177, %178 : vector<16x128xf32>
    %180 = math.exp %179 : vector<16x128xf32>
    %181 = arith.mulf %171, %180 : vector<16x128xf32>
    %c0_141 = arith.constant 0 : index
    %c6_142 = arith.constant 6 : index
    %c0_143 = arith.constant 0 : index
    %c0_144 = arith.constant 0 : index
    %c0_145 = arith.constant 0 : index
    %182 = vector.load %arg2[%c0_141, %c6_142, %c0_143, %c0_144, %c0_145] : memref<1x8x3x16x128xbf16, #tpu.memory_space<vmem>>, vector<1x1x1x16x128xbf16>
    %183 = vector.shape_cast %182 : vector<1x1x1x16x128xbf16> to vector<16x128xbf16>
    %184 = arith.extf %183 : vector<16x128xbf16> to vector<16x128xf32>
    %185 = arith.mulf %181, %184 : vector<16x128xf32>
    %186 = arith.addf %158, %185 : vector<16x128xf32>
    %c0_146 = arith.constant 0 : index
    %c6_147 = arith.constant 6 : index
    %c1_148 = arith.constant 1 : index
    %c0_149 = arith.constant 0 : index
    %c0_150 = arith.constant 0 : index
    %187 = vector.load %arg2[%c0_146, %c6_147, %c1_148, %c0_149, %c0_150] : memref<1x8x3x16x128xbf16, #tpu.memory_space<vmem>>, vector<1x1x1x16x128xbf16>
    %188 = vector.shape_cast %187 : vector<1x1x1x16x128xbf16> to vector<16x128xbf16>
    %189 = arith.extf %188 : vector<16x128xbf16> to vector<16x128xf32>
    %190 = arith.mulf %181, %189 : vector<16x128xf32>
    %191 = arith.addf %163, %190 : vector<16x128xf32>
    %c0_151 = arith.constant 0 : index
    %c6_152 = arith.constant 6 : index
    %c2_153 = arith.constant 2 : index
    %c0_154 = arith.constant 0 : index
    %c0_155 = arith.constant 0 : index
    %192 = vector.load %arg2[%c0_151, %c6_152, %c2_153, %c0_154, %c0_155] : memref<1x8x3x16x128xbf16, #tpu.memory_space<vmem>>, vector<1x1x1x16x128xbf16>
    %193 = vector.shape_cast %192 : vector<1x1x1x16x128xbf16> to vector<16x128xbf16>
    %194 = arith.extf %193 : vector<16x128xbf16> to vector<16x128xf32>
    %195 = arith.mulf %181, %194 : vector<16x128xf32>
    %196 = arith.addf %168, %195 : vector<16x128xf32>
    %cst_156 = arith.constant 1.000000e+00 : f32
    %197 = vector.broadcast %cst_156 : f32 to vector<16x128xf32>
    %198 = arith.subf %197, %180 : vector<16x128xf32>
    %199 = arith.mulf %171, %198 : vector<16x128xf32>
    %c0_157 = arith.constant 0 : index
    %c7 = arith.constant 7 : index
    %c0_158 = arith.constant 0 : index
    %c0_159 = arith.constant 0 : index
    %200 = vector.load %arg3[%c0_157, %c7, %c0_158, %c0_159] : memref<1x8x16x128xf32, #tpu.memory_space<vmem>>, vector<1x1x16x128xf32>
    %201 = vector.shape_cast %200 : vector<1x1x16x128xf32> to vector<16x128xf32>
    %cst_160 = arith.constant 0.000000e+00 : f32
    %202 = vector.broadcast %cst_160 : f32 to vector<16x128xf32>
    %203 = arith.maximumf %201, %202 : vector<16x128xf32>
    %cst_161 = arith.constant 0.000000e+00 : f32
    %204 = vector.broadcast %cst_161 : f32 to vector<16x128xf32>
    %205 = arith.subf %204, %203 : vector<16x128xf32>
    %cst_162 = arith.constant 1.000000e+04 : f32
    %206 = vector.broadcast %cst_162 : f32 to vector<16x128xf32>
    %207 = arith.mulf %205, %206 : vector<16x128xf32>
    %208 = math.exp %207 : vector<16x128xf32>
    %209 = arith.mulf %199, %208 : vector<16x128xf32>
    %c0_163 = arith.constant 0 : index
    %c7_164 = arith.constant 7 : index
    %c0_165 = arith.constant 0 : index
    %c0_166 = arith.constant 0 : index
    %c0_167 = arith.constant 0 : index
    %210 = vector.load %arg2[%c0_163, %c7_164, %c0_165, %c0_166, %c0_167] : memref<1x8x3x16x128xbf16, #tpu.memory_space<vmem>>, vector<1x1x1x16x128xbf16>
    %211 = vector.shape_cast %210 : vector<1x1x1x16x128xbf16> to vector<16x128xbf16>
    %212 = arith.extf %211 : vector<16x128xbf16> to vector<16x128xf32>
    %213 = arith.mulf %209, %212 : vector<16x128xf32>
    %214 = arith.addf %186, %213 : vector<16x128xf32>
    %c0_168 = arith.constant 0 : index
    %c7_169 = arith.constant 7 : index
    %c1_170 = arith.constant 1 : index
    %c0_171 = arith.constant 0 : index
    %c0_172 = arith.constant 0 : index
    %215 = vector.load %arg2[%c0_168, %c7_169, %c1_170, %c0_171, %c0_172] : memref<1x8x3x16x128xbf16, #tpu.memory_space<vmem>>, vector<1x1x1x16x128xbf16>
    %216 = vector.shape_cast %215 : vector<1x1x1x16x128xbf16> to vector<16x128xbf16>
    %217 = arith.extf %216 : vector<16x128xbf16> to vector<16x128xf32>
    %218 = arith.mulf %209, %217 : vector<16x128xf32>
    %219 = arith.addf %191, %218 : vector<16x128xf32>
    %c0_173 = arith.constant 0 : index
    %c7_174 = arith.constant 7 : index
    %c2_175 = arith.constant 2 : index
    %c0_176 = arith.constant 0 : index
    %c0_177 = arith.constant 0 : index
    %220 = vector.load %arg2[%c0_173, %c7_174, %c2_175, %c0_176, %c0_177] : memref<1x8x3x16x128xbf16, #tpu.memory_space<vmem>>, vector<1x1x1x16x128xbf16>
    %221 = vector.shape_cast %220 : vector<1x1x1x16x128xbf16> to vector<16x128xbf16>
    %222 = arith.extf %221 : vector<16x128xbf16> to vector<16x128xf32>
    %223 = arith.mulf %209, %222 : vector<16x128xf32>
    %224 = arith.addf %196, %223 : vector<16x128xf32>
    %cst_178 = arith.constant 1.000000e+00 : f32
    %225 = vector.broadcast %cst_178 : f32 to vector<16x128xf32>
    %226 = arith.subf %225, %208 : vector<16x128xf32>
    %227 = arith.mulf %199, %226 : vector<16x128xf32>
    %c0_179 = arith.constant 0 : index
    %c0_180 = arith.constant 0 : index
    %c0_181 = arith.constant 0 : index
    %c0_182 = arith.constant 0 : index
    %228 = vector.load %arg4[%c0_179, %c0_180, %c0_181, %c0_182] : memref<1x4x16x128xf32, #tpu.memory_space<vmem>>, vector<1x1x16x128xf32>
    %229 = vector.shape_cast %228 : vector<1x1x16x128xf32> to vector<16x128xf32>
    %230 = vector.shape_cast %214 : vector<16x128xf32> to vector<1x1x16x128xf32>
    tpu.vector_store %arg4[%c0_179, %c0_180, %c0_181, %c0_182], %230 {strides = array<i32>} : memref<1x4x16x128xf32, #tpu.memory_space<vmem>>, vector<1x1x16x128xf32>,
    %c0_183 = arith.constant 0 : index
    %c1_184 = arith.constant 1 : index
    %c0_185 = arith.constant 0 : index
    %c0_186 = arith.constant 0 : index
    %231 = vector.load %arg4[%c0_183, %c1_184, %c0_185, %c0_186] : memref<1x4x16x128xf32, #tpu.memory_space<vmem>>, vector<1x1x16x128xf32>
    %232 = vector.shape_cast %231 : vector<1x1x16x128xf32> to vector<16x128xf32>
    %233 = vector.shape_cast %219 : vector<16x128xf32> to vector<1x1x16x128xf32>
    tpu.vector_store %arg4[%c0_183, %c1_184, %c0_185, %c0_186], %233 {strides = array<i32>} : memref<1x4x16x128xf32, #tpu.memory_space<vmem>>, vector<1x1x16x128xf32>,
    %c0_187 = arith.constant 0 : index
    %c2_188 = arith.constant 2 : index
    %c0_189 = arith.constant 0 : index
    %c0_190 = arith.constant 0 : index
    %234 = vector.load %arg4[%c0_187, %c2_188, %c0_189, %c0_190] : memref<1x4x16x128xf32, #tpu.memory_space<vmem>>, vector<1x1x16x128xf32>
    %235 = vector.shape_cast %234 : vector<1x1x16x128xf32> to vector<16x128xf32>
    %236 = vector.shape_cast %224 : vector<16x128xf32> to vector<1x1x16x128xf32>
    tpu.vector_store %arg4[%c0_187, %c2_188, %c0_189, %c0_190], %236 {strides = array<i32>} : memref<1x4x16x128xf32, #tpu.memory_space<vmem>>, vector<1x1x16x128xf32>,
    %cst_191 = arith.constant 1.000000e+00 : f32
    %237 = vector.broadcast %cst_191 : f32 to vector<16x128xf32>
    %238 = arith.subf %237, %227 : vector<16x128xf32>
    %c0_192 = arith.constant 0 : index
    %c3_193 = arith.constant 3 : index
    %c0_194 = arith.constant 0 : index
    %c0_195 = arith.constant 0 : index
    %239 = vector.load %arg4[%c0_192, %c3_193, %c0_194, %c0_195] : memref<1x4x16x128xf32, #tpu.memory_space<vmem>>, vector<1x1x16x128xf32>
    %240 = vector.shape_cast %239 : vector<1x1x16x128xf32> to vector<16x128xf32>
    %241 = vector.shape_cast %238 : vector<16x128xf32> to vector<1x1x16x128xf32>
    tpu.vector_store %arg4[%c0_192, %c3_193, %c0_194, %c0_195], %241 {strides = array<i32>} : memref<1x4x16x128xf32, #tpu.memory_space<vmem>>, vector<1x1x16x128xf32>,
    return
  }
  func.func @transform_0(%arg0: i32, %arg1: i32) -> (i32, i32, i32, i32, i32) {
    %c0_i32 = arith.constant 0 : i32
    %c0_i32_0 = arith.constant 0 : i32
    %c0_i32_1 = arith.constant 0 : i32
    %c0_i32_2 = arith.constant 0 : i32
    return %arg0, %c0_i32, %c0_i32_0, %arg1, %c0_i32_1 : i32, i32, i32, i32, i32
  }
  func.func @transform_1(%arg0: i32, %arg1: i32) -> (i32, i32, i32, i32) {
    %c0_i32 = arith.constant 0 : i32
    %c0_i32_0 = arith.constant 0 : i32
    %c0_i32_1 = arith.constant 0 : i32
    return %arg0, %c0_i32, %arg1, %c0_i32_0 : i32, i32, i32, i32
  }
  func.func @transform_2(%arg0: i32, %arg1: i32) -> (i32, i32, i32, i32) {
    %c0_i32 = arith.constant 0 : i32
    %c0_i32_0 = arith.constant 0 : i32
    %c0_i32_1 = arith.constant 0 : i32
    return %arg0, %c0_i32, %arg1, %c0_i32_0 : i32, i32, i32, i32
  }
}

</mosaic_0001>

<llo_original>
// kernel: tpu_custom_call.1
$region0: #{tpu_custom_call.1}
  #allocation0 [shape = 'u32[]', space=smem, size = 0x4, offset = 0x4, fixed_abs, tag = 'smem constant byte address 0x4 - core index']
  #allocation1 [shape = 'u32[144,128]{1,0:T(1,128)}', space=vmem, size = 0x12000, scoped, tag = 'internal scratch']
  %s0 = inlined_call_operand.hbm [shape: bf16[2,8,3,16,128], index: 0, kind: input, shape index: {}]
  %s1 = inlined_call_operand.hbm [shape: f32[2,8,16,128], index: 1, kind: input, shape index: {}]
  %s2 = inlined_call_operand.hbm [shape: f32[2,4,16,128], index: 2, kind: output, shape index: {}]
  %s3 = sld [smem:[#allocation0]]
  $region49: #{tpu_custom_call.1} parent=0
    _
  %s5 = ssub.s32 1, %s3
  %s6 = scalar_select 0, %s5, %s3
  $region1: #{tpu_custom_call.1} parent=0
    #allocation2 [shape = 'u8[196608]{0}', space=vmem, size = 0x30000, scoped, tag = 'input window, operand 0']
    #allocation3 [shape = 's32[2]{0}', space=sflag, size = 0x8, scoped, tag = 'scoped memory for tpu_custom_call.1']
    #allocation4 [shape = 's32[2]{0}', space=sflag, size = 0x8, scoped, tag = 'scoped memory for tpu_custom_call.1']
    #allocation5 [shape = 'u8[131072]{0}', space=vmem, size = 0x20000, scoped, tag = 'input window, operand 1']
    #allocation6 [shape = 's32[2]{0}', space=sflag, size = 0x8, scoped, tag = 'scoped memory for tpu_custom_call.1']
    #allocation7 [shape = 'u8[65536]{0}', space=vmem, size = 0x10000, scoped, tag = 'output window, operand 0']
    %7 = vsyncpa [#allocation3], 0
    %s8 = scalar_lea.sflag [#allocation3], 1
    %9 = vsyncpa %s8, 0
    %10 = vsyncpa [#allocation6], 0
    %s11 = scalar_lea.sflag [#allocation6], 1
    %12 = vsyncpa %s11, 0
    %13 = vsyncpa [#allocation4], 0
    %s14 = scalar_lea.sflag [#allocation4], 1
    %15 = vsyncpa %s14, 0
    loop: start=0, step=1, limit=4
    $region2: #{tpu_custom_call.1} parent=1 // loop_pre_header
      _
    $region3: #{tpu_custom_call.1} parent=1 // loop_header
      %s17 = sphi 0, %s21
      %p18 = scmp.ge.s32.totalorder %s17, 4
      %s24 = sphi 0, %s36
      %s25 = sphi 0, %s32
      %s26 = sphi 0, %s24
      %s27 = sphi 0, %s25
      %s28 = sphi 0, %s26
      %s29 = sphi 0, %s27
      %s41 = sphi 0, %s43
      %s44 = sphi 0, %s41
      %s45 = sphi 0, %s44
      %s61 = sphi 0, %s45
      %s69 = sphi 0, %s71
      %s72 = sphi 0, %s69
      %s73 = sphi 0, %s72
      %s89 = sphi 0, %s73
      %s97 = sphi 0, %s99
      %s100 = sphi 0, %s97
      %s101 = sphi 0, %s100
      %s117 = sphi 0, %s101
    $region4: #{tpu_custom_call.1} parent=1 // loop_header_branch
      %20 = sbr.rel (%p18) target = $region8
    $region5: #{tpu_custom_call.1} parent=1 // loop_body
      %s22 = ssub.s32 %s17, 1
      %s23 = ssub.s32 %s17, 2
      %s30 = sadd.s32 1, %s25
      %p31 = scmp.ge.s32.totalorder %s30, 1
      %s32 = scalar_select %p31, 0, %s30
      %s33 = sadd.s32 1, %s24
      %s34 = scalar_select %p31, %s33, %s24
      %p35 = scmp.ge.s32.totalorder %s34, 2
      %s36 = scalar_select %p35, 0, %s34
      %s37 = ssub.s32 %s24, %s36
      %s38 = ssub.s32 %s25, %s32
      %s39 = sor.u32 %s37, %s38
      %p40 = scmp.eq.s32.totalorder %s39, 0
      %s42 = sadd.s32 %s41, 1
      %s43 = scalar_select %p40, %s41, %s42
      %p46 = pneg %p40
      %p47 = scmp.eq.s32.totalorder %s17, 1
      %p48 = por %p46, %p47
      %p49 = scmp.ne.s32.totalorder %s41, %s44
      %p50 = scmp.eq.s32.totalorder %s17, 0
      %p51 = por %p49, %p50
      %p52 = scmp.ne.s32.totalorder %s41, %s44
      %p53 = scmp.eq.s32.totalorder %s22, 1
      %p54 = por %p52, %p53
      %p55 = scmp.ne.s32.totalorder %s44, %s45
      %p56 = scmp.eq.s32.totalorder %s22, 0
      %p57 = por %p55, %p56
      %p58 = scmp.ne.s32.totalorder %s44, %s45
      %p59 = scmp.eq.s32.totalorder %s23, 1
      %p60 = por %p58, %p59
      %p62 = scmp.ne.s32.totalorder %s45, %s61
      %p63 = scmp.eq.s32.totalorder %s23, 0
      %p64 = por %p62, %p63
      %s65 = ssub.s32 %s24, %s36
      %s66 = ssub.s32 %s25, %s32
      %s67 = sor.u32 %s65, %s66
      %p68 = scmp.eq.s32.totalorder %s67, 0
      %s70 = sadd.s32 %s69, 1
      %s71 = scalar_select %p68, %s69, %s70
      %p74 = pneg %p68
      %p75 = scmp.eq.s32.totalorder %s17, 1
      %p76 = por %p74, %p75
      %p77 = scmp.ne.s32.totalorder %s69, %s72
      %p78 = scmp.eq.s32.totalorder %s17, 0
      %p79 = por %p77, %p78
      %p80 = scmp.ne.s32.totalorder %s69, %s72
      %p81 = scmp.eq.s32.totalorder %s22, 1
      %p82 = por %p80, %p81
      %p83 = scmp.ne.s32.totalorder %s72, %s73
      %p84 = scmp.eq.s32.totalorder %s22, 0
      %p85 = por %p83, %p84
      %p86 = scmp.ne.s32.totalorder %s72, %s73
      %p87 = scmp.eq.s32.totalorder %s23, 1
      %p88 = por %p86, %p87
      %p90 = scmp.ne.s32.totalorder %s73, %s89
      %p91 = scmp.eq.s32.totalorder %s23, 0
      %p92 = por %p90, %p91
      %s93 = ssub.s32 %s24, %s36
      %s94 = ssub.s32 %s25, %s32
      %s95 = sor.u32 %s93, %s94
      %p96 = scmp.eq.s32.totalorder %s95, 0
      %s98 = sadd.s32 %s97, 1
      %s99 = scalar_select %p96, %s97, %s98
      %p102 = pneg %p96
      %p103 = scmp.eq.s32.totalorder %s17, 1
      %p104 = por %p102, %p103
      %p105 = scmp.ne.s32.totalorder %s97, %s100
      %p106 = scmp.eq.s32.totalorder %s17, 0
      %p107 = por %p105, %p106
      %p108 = scmp.ne.s32.totalorder %s97, %s100
      %p109 = scmp.eq.s32.totalorder %s22, 1
      %p110 = por %p108, %p109
      %p111 = scmp.ne.s32.totalorder %s100, %s101
      %p112 = scmp.eq.s32.totalorder %s22, 0
      %p113 = por %p111, %p112
      %p114 = scmp.ne.s32.totalorder %s100, %s101
      %p115 = scmp.eq.s32.totalorder %s23, 1
      %p116 = por %p114, %p115
      %p118 = scmp.ne.s32.totalorder %s101, %s117
      %p119 = scmp.eq.s32.totalorder %s23, 0
      %p120 = por %p118, %p119
      %p121 = scmp.le.s32.totalorder 1, %s17
      %p122 = scmp.lt.s32.totalorder %s17, 3
      %p123 = pnand %p121, %p122
      %p124 = pneg %p123
      // Predicated region
      $region9: #{tpu_custom_call.1} parent=5 // pred_check
        _
      $region10: #{tpu_custom_call.1} parent=5 // pred_check_branch
        %126 = sbr.rel (%p123) target = $region12
      $region11: #{tpu_custom_call.1} parent=5 // pred_region
        %s127 = ssub.s32 %s17, 1
      $region12: #{tpu_custom_call.1} parent=5 // pred_fallthru
        _
      %p128 = scmp.lt.s32.totalorder %s17, 2
      // Predicated region
      $region13: #{tpu_custom_call.1} parent=5 // pred_check
        %p129 = pneg %p128
      $region14: #{tpu_custom_call.1} parent=5 // pred_check_branch
        %131 = sbr.rel (%p129) target = $region16
      $region15: #{tpu_custom_call.1} parent=5 // pred_region
        // Predicated region
        $region17: #{tpu_custom_call.1} parent=15 // pred_check
          %p132 = pneg %p51
        $region18: #{tpu_custom_call.1} parent=15 // pred_check_branch
          %134 = sbr.rel (%p132) target = $region20
        $region19: #{tpu_custom_call.1} parent=15 // pred_region
          %s135 = sand.u32 %s41, 1
          %s136 = scalar_lea.sflag [#allocation3], %s135
          %s137 = sand.u32 %s41, 1
          %s138 = smul.addr %s137, 192
          %s139 = scalar_lea.vmem [#allocation2], %s138
          %s140 = smul.u32 2, %s25
          %s142 = ssub.s32 3072, 3072
          %143 = vsyncadd %s136, %s142
          %s144 = smul.addr %s24, 48
          %s145 = sadd.s32 %s140, %s144
          %s146 = smul.addr %s145, 64
          %s147 = scalar_lea.hbm %s0, %s146
          %s148 = sshll.u32 %s139, 4
          %s149 = int_to_ptr.vmem [resolvable:$true] %s148
          %154 = dma.hbm_to_vmem [thread:$0]  %s147, 3072, %s149, %s136, 64, 64, 4
        $region20: #{tpu_custom_call.1} parent=15 // pred_fallthru
          _
        // Predicated region
        $region21: #{tpu_custom_call.1} parent=15 // pred_check
          %p155 = pneg %p79
        $region22: #{tpu_custom_call.1} parent=15 // pred_check_branch
          %157 = sbr.rel (%p155) target = $region24
        $region23: #{tpu_custom_call.1} parent=15 // pred_region
          %s158 = sand.u32 %s69, 1
          %s159 = scalar_lea.sflag [#allocation6], %s158
          %s160 = sand.u32 %s69, 1
          %s161 = smul.addr %s160, 128
          %s162 = scalar_lea.vmem [#allocation5], %s161
          %s163 = smul.u32 2, %s25
          %s165 = ssub.s32 2048, 2048
          %166 = vsyncadd %s159, %s165
          %s167 = smul.addr %s24, 16
          %s168 = sadd.s32 %s163, %s167
          %s169 = smul.addr %s168, 128
          %s170 = scalar_lea.hbm %s1, %s169
          %s171 = sshll.u32 %s162, 4
          %s172 = int_to_ptr.vmem [resolvable:$true] %s171
          %177 = dma.hbm_to_vmem [thread:$0]  %s170, 2048, %s172, %s159, 128, 128, 8
        $region24: #{tpu_custom_call.1} parent=15 // pred_fallthru
          _
      $region16: #{tpu_custom_call.1} parent=5 // pred_fallthru
        _
      %p178 = scmp.le.s32.totalorder 1, %s17
      %p179 = scmp.lt.s32.totalorder %s17, 3
      %p180 = pnand %p178, %p179
      %p181 = pneg %p180
      // Predicated region
      $region25: #{tpu_custom_call.1} parent=5 // pred_check
        _
      $region26: #{tpu_custom_call.1} parent=5 // pred_check_branch
        %183 = sbr.rel (%p180) target = $region28
      $region27: #{tpu_custom_call.1} parent=5 // pred_region
        %s184 = ssub.s32 %s17, 1
        %s185 = sand.u32 %s44, 1
        %s186 = scalar_lea.sflag [#allocation3], %s185
        %s187 = sand.u32 %s44, 1
        %s188 = smul.addr %s187, 192
        %s189 = scalar_lea.vmem [#allocation2], %s188
        // Predicated region
        $region29: #{tpu_custom_call.1} parent=27 // pred_check
          %p190 = pneg %p57
        $region30: #{tpu_custom_call.1} parent=27 // pred_check_branch
          %192 = sbr.rel (%p190) target = $region32
        $region31: #{tpu_custom_call.1} parent=27 // pred_region
          %193 = dma.done %s186, 3072
        $region32: #{tpu_custom_call.1} parent=27 // pred_fallthru
          _
        %s194 = sand.u32 %s72, 1
        %s195 = scalar_lea.sflag [#allocation6], %s194
        %s196 = sand.u32 %s72, 1
        %s197 = smul.addr %s196, 128
        %s198 = scalar_lea.vmem [#allocation5], %s197
        // Predicated region
        $region33: #{tpu_custom_call.1} parent=27 // pred_check
          %p199 = pneg %p85
        $region34: #{tpu_custom_call.1} parent=27 // pred_check_branch
          %201 = sbr.rel (%p199) target = $region36
        $region35: #{tpu_custom_call.1} parent=27 // pred_region
          %202 = dma.done %s195, 2048
        $region36: #{tpu_custom_call.1} parent=27 // pred_fallthru
          _
        %s203 = sand.u32 %s44, 1
        %s204 = scalar_lea.sflag [#allocation3], %s203
        %s205 = sand.u32 %s44, 1
        %s206 = smul.addr %s205, 192
        %s207 = scalar_lea.vmem [#allocation2], %s206
        %p208 = pneg %p57
        %p209 = pneg %p54
        %s210 = sand.u32 %s72, 1
        %s211 = scalar_lea.sflag [#allocation6], %s210
        %s212 = sand.u32 %s72, 1
        %s213 = smul.addr %s212, 128
        %s214 = scalar_lea.vmem [#allocation5], %s213
        %p215 = pneg %p85
        %p216 = pneg %p82
        %p217 = pneg %p113
        %p218 = pneg %p110
        %s219 = sand.u32 %s100, 1
        %s220 = scalar_lea.sflag [#allocation4], %s219
        %s221 = sand.u32 %s100, 1
        %s222 = smul.addr %s221, 64
        %s223 = scalar_lea.vmem [#allocation7], %s222
        %s224 = smul.u32 2, %s27
        %s225 = smul.u32 2, %s27
        %s226 = smul.u32 2, %s27
        %v227 = vld [vmem:[%s198] sm:$0xff]
        %v228 = vld [vmem:[%s198 + $0x8] sm:$0xff]
        %v229 = vmax.f32 %v227, 0.0
        %v230 = vmax.f32 %v228, 0.0
        %v231 = vsub.f32 0.0, %v229
        %v232 = vsub.f32 0.0, %v230
        %v233 = vmul.f32 %v231, 10000.0
        %v234 = vmul.f32 %v232, 10000.0
        %v235 = vmul.f32 %v233, 1.442695
        %v236 = vpow.pop %v235
        %v237 = vmul.f32 %v234, 1.442695
        %v238 = vpow.pop %v237
        %v239 = vld [vmem:[%s189] sm:$0xf]
        %v240 = vld [vmem:[%s189 + $0x4] sm:$0xf]
        %v241 = vunpack.c.l.bf16 %v239
        %v242 = vunpack.c.l.bf16 %v240
        %v243 = vmul.f32 %v236, %v241
        %v244 = vmul.f32 %v238, %v242
        %v245 = vadd.f32 %v243, 0.0
        %v246 = vadd.f32 %v244, 0.0
        %s247 = scalar_lea.vmem %s189, 8 [#allocation2]
        %v248 = vld [vmem:[%s247] sm:$0xf]
        %v249 = vld [vmem:[%s247 + $0x4] sm:$0xf]
        %v250 = vunpack.c.l.bf16 %v248
        %v251 = vunpack.c.l.bf16 %v249
        %v252 = vmul.f32 %v236, %v250
        %v253 = vmul.f32 %v238, %v251
        %v254 = vadd.f32 %v252, 0.0
        %v255 = vadd.f32 %v253, 0.0
        %s256 = scalar_lea.vmem %s189, 16 [#allocation2]
        %v257 = vld [vmem:[%s256] sm:$0xf]
        %v258 = vld [vmem:[%s256 + $0x4] sm:$0xf]
        %v259 = vunpack.c.l.bf16 %v257
        %v260 = vunpack.c.l.bf16 %v258
        %v261 = vmul.f32 %v236, %v259
        %v262 = vmul.f32 %v238, %v260
        %v263 = vadd.f32 %v261, 0.0
        %v264 = vadd.f32 %v262, 0.0
        %v265 = vsub.f32 1.0, %v236
        %v266 = vsub.f32 1.0, %v238
        %s267 = scalar_lea.vmem %s198, 16 [#allocation5]
        %v268 = vld [vmem:[%s267] sm:$0xff]
        %v269 = vld [vmem:[%s267 + $0x8] sm:$0xff]
        %v270 = vmax.f32 %v268, 0.0
        %v271 = vmax.f32 %v269, 0.0
        %v272 = vsub.f32 0.0, %v270
        %v273 = vsub.f32 0.0, %v271
        %v274 = vmul.f32 %v272, 10000.0
        %v275 = vmul.f32 %v273, 10000.0
        %v276 = vmul.f32 %v274, 1.442695
        %v277 = vpow.pop %v276
        %v278 = vmul.f32 %v275, 1.442695
        %v279 = vpow.pop %v278
        %v280 = vmul.f32 %v265, %v277
        %v281 = vmul.f32 %v266, %v279
        %s282 = scalar_lea.vmem %s189, 24 [#allocation2]
        %v283 = vld [vmem:[%s282] sm:$0xf]
        %v284 = vld [vmem:[%s282 + $0x4] sm:$0xf]
        %v285 = vunpack.c.l.bf16 %v283
        %v286 = vunpack.c.l.bf16 %v284
        %v287 = vmul.f32 %v280, %v285
        %v288 = vmul.f32 %v281, %v286
        %v289 = vadd.f32 %v245, %v287
        %v290 = vadd.f32 %v246, %v288
        %s291 = scalar_lea.vmem %s189, 32 [#allocation2]
        %v292 = vld [vmem:[%s291] sm:$0xf]
        %v293 = vld [vmem:[%s291 + $0x4] sm:$0xf]
        %v294 = vunpack.c.l.bf16 %v292
        %v295 = vunpack.c.l.bf16 %v293
        %v296 = vmul.f32 %v280, %v294
        %v297 = vmul.f32 %v281, %v295
        %v298 = vadd.f32 %v254, %v296
        %v299 = vadd.f32 %v255, %v297
        %s300 = scalar_lea.vmem %s189, 40 [#allocation2]
        %v301 = vld [vmem:[%s300] sm:$0xf]
        %v302 = vld [vmem:[%s300 + $0x4] sm:$0xf]
        %v303 = vunpack.c.l.bf16 %v301
        %v304 = vunpack.c.l.bf16 %v302
        %v305 = vmul.f32 %v280, %v303
        %v306 = vmul.f32 %v281, %v304
        %v307 = vadd.f32 %v263, %v305
        %v308 = vadd.f32 %v264, %v306
        %v309 = vsub.f32 1.0, %v277
        %v310 = vsub.f32 1.0, %v279
        %v311 = vmul.f32 %v265, %v309
        %v312 = vmul.f32 %v266, %v310
        %s313 = scalar_lea.vmem %s198, 32 [#allocation5]
        %v314 = vld [vmem:[%s313] sm:$0xff]
        %v315 = vld [vmem:[%s313 + $0x8] sm:$0xff]
        %v316 = vmax.f32 %v314, 0.0
        %v317 = vmax.f32 %v315, 0.0
        %v318 = vsub.f32 0.0, %v316
        %v319 = vsub.f32 0.0, %v317
        %v320 = vmul.f32 %v318, 10000.0
        %v321 = vmul.f32 %v319, 10000.0
        %v322 = vmul.f32 %v320, 1.442695
        %v323 = vpow.pop %v322
        %v324 = vmul.f32 %v321, 1.442695
        %v325 = vpow.pop %v324
        %v326 = vmul.f32 %v311, %v323
        %v327 = vmul.f32 %v312, %v325
        %s328 = scalar_lea.vmem %s189, 48 [#allocation2]
        %v329 = vld [vmem:[%s328] sm:$0xf]
        %v330 = vld [vmem:[%s328 + $0x4] sm:$0xf]
        %v331 = vunpack.c.l.bf16 %v329
        %v332 = vunpack.c.l.bf16 %v330
        %v333 = vmul.f32 %v326, %v331
        %v334 = vmul.f32 %v327, %v332
        %v335 = vadd.f32 %v289, %v333
        %v336 = vadd.f32 %v290, %v334
        %s337 = scalar_lea.vmem %s189, 56 [#allocation2]
        %v338 = vld [vmem:[%s337] sm:$0xf]
        %v339 = vld [vmem:[%s337 + $0x4] sm:$0xf]
        %v340 = vunpack.c.l.bf16 %v338
        %v341 = vunpack.c.l.bf16 %v339
        %v342 = vmul.f32 %v326, %v340
        %v343 = vmul.f32 %v327, %v341
        %v344 = vadd.f32 %v298, %v342
        %v345 = vadd.f32 %v299, %v343
        %s346 = scalar_lea.vmem %s189, 64 [#allocation2]
        %v347 = vld [vmem:[%s346] sm:$0xf]
        %v348 = vld [vmem:[%s346 + $0x4] sm:$0xf]
        %v349 = vunpack.c.l.bf16 %v347
        %v350 = vunpack.c.l.bf16 %v348
        %v351 = vmul.f32 %v326, %v349
        %v352 = vmul.f32 %v327, %v350
        %v353 = vadd.f32 %v307, %v351
        %v354 = vadd.f32 %v308, %v352
        %v355 = vsub.f32 1.0, %v323
        %v356 = vsub.f32 1.0, %v325
        %v357 = vmul.f32 %v311, %v355
        %v358 = vmul.f32 %v312, %v356
        %s359 = scalar_lea.vmem %s198, 48 [#allocation5]
        %v360 = vld [vmem:[%s359] sm:$0xff]
        %v361 = vld [vmem:[%s359 + $0x8] sm:$0xff]
        %v362 = vmax.f32 %v360, 0.0
        %v363 = vmax.f32 %v361, 0.0
        %v364 = vsub.f32 0.0, %v362
        %v365 = vsub.f32 0.0, %v363
        %v366 = vmul.f32 %v364, 10000.0
        %v367 = vmul.f32 %v365, 10000.0
        %v368 = vmul.f32 %v366, 1.442695
        %v369 = vpow.pop %v368
        %v370 = vmul.f32 %v367, 1.442695
        %v371 = vpow.pop %v370
        %v372 = vmul.f32 %v357, %v369
        %v373 = vmul.f32 %v358, %v371
        %s374 = scalar_lea.vmem %s189, 72 [#allocation2]
        %v375 = vld [vmem:[%s374] sm:$0xf]
        %v376 = vld [vmem:[%s374 + $0x4] sm:$0xf]
        %v377 = vunpack.c.l.bf16 %v375
        %v378 = vunpack.c.l.bf16 %v376
        %v379 = vmul.f32 %v372, %v377
        %v380 = vmul.f32 %v373, %v378
        %v381 = vadd.f32 %v335, %v379
        %v382 = vadd.f32 %v336, %v380
        %s383 = scalar_lea.vmem %s189, 80 [#allocation2]
        %v384 = vld [vmem:[%s383] sm:$0xf]
        %v385 = vld [vmem:[%s383 + $0x4] sm:$0xf]
        %v386 = vunpack.c.l.bf16 %v384
        %v387 = vunpack.c.l.bf16 %v385
        %v388 = vmul.f32 %v372, %v386
        %v389 = vmul.f32 %v373, %v387
        %v390 = vadd.f32 %v344, %v388
        %v391 = vadd.f32 %v345, %v389
        %s392 = scalar_lea.vmem %s189, 88 [#allocation2]
        %v393 = vld [vmem:[%s392] sm:$0xf]
        %v394 = vld [vmem:[%s392 + $0x4] sm:$0xf]
        %v395 = vunpack.c.l.bf16 %v393
        %v396 = vunpack.c.l.bf16 %v394
        %v397 = vmul.f32 %v372, %v395
        %v398 = vmul.f32 %v373, %v396
        %v399 = vadd.f32 %v353, %v397
        %v400 = vadd.f32 %v354, %v398
        %v401 = vsub.f32 1.0, %v369
        %v402 = vsub.f32 1.0, %v371
        %v403 = vmul.f32 %v357, %v401
        %v404 = vmul.f32 %v358, %v402
        %s405 = scalar_lea.vmem %s198, 64 [#allocation5]
        %v406 = vld [vmem:[%s405] sm:$0xff]
        %v407 = vld [vmem:[%s405 + $0x8] sm:$0xff]
        %v408 = vmax.f32 %v406, 0.0
        %v409 = vmax.f32 %v407, 0.0
        %v410 = vsub.f32 0.0, %v408
        %v411 = vsub.f32 0.0, %v409
        %v412 = vmul.f32 %v410, 10000.0
        %v413 = vmul.f32 %v411, 10000.0
        %v414 = vmul.f32 %v412, 1.442695
        %v415 = vpow.pop %v414
        %v416 = vmul.f32 %v413, 1.442695
        %v417 = vpow.pop %v416
        %v418 = vmul.f32 %v403, %v415
        %v419 = vmul.f32 %v404, %v417
        %s420 = scalar_lea.vmem %s189, 96 [#allocation2]
        %v421 = vld [vmem:[%s420] sm:$0xf]
        %v422 = vld [vmem:[%s420 + $0x4] sm:$0xf]
        %v423 = vunpack.c.l.bf16 %v421
        %v424 = vunpack.c.l.bf16 %v422
        %v425 = vmul.f32 %v418, %v423
        %v426 = vmul.f32 %v419, %v424
        %v427 = vadd.f32 %v381, %v425
        %v428 = vadd.f32 %v382, %v426
        %s429 = scalar_lea.vmem %s189, 104 [#allocation2]
        %v430 = vld [vmem:[%s429] sm:$0xf]
        %v431 = vld [vmem:[%s429 + $0x4] sm:$0xf]
        %v432 = vunpack.c.l.bf16 %v430
        %v433 = vunpack.c.l.bf16 %v431
        %v434 = vmul.f32 %v418, %v432
        %v435 = vmul.f32 %v419, %v433
        %v436 = vadd.f32 %v390, %v434
        %v437 = vadd.f32 %v391, %v435
        %s438 = scalar_lea.vmem %s189, 112 [#allocation2]
        %v439 = vld [vmem:[%s438] sm:$0xf]
        %v440 = vld [vmem:[%s438 + $0x4] sm:$0xf]
        %v441 = vunpack.c.l.bf16 %v439
        %v442 = vunpack.c.l.bf16 %v440
        %v443 = vmul.f32 %v418, %v441
        %v444 = vmul.f32 %v419, %v442
        %v445 = vadd.f32 %v399, %v443
        %v446 = vadd.f32 %v400, %v444
        %v447 = vsub.f32 1.0, %v415
        %v448 = vsub.f32 1.0, %v417
        %v449 = vmul.f32 %v403, %v447
        %v450 = vmul.f32 %v404, %v448
        %s451 = scalar_lea.vmem %s198, 80 [#allocation5]
        %v452 = vld [vmem:[%s451] sm:$0xff]
        %v453 = vld [vmem:[%s451 + $0x8] sm:$0xff]
        %v454 = vmax.f32 %v452, 0.0
        %v455 = vmax.f32 %v453, 0.0
        %v456 = vsub.f32 0.0, %v454
        %v457 = vsub.f32 0.0, %v455
        %v458 = vmul.f32 %v456, 10000.0
        %v459 = vmul.f32 %v457, 10000.0
        %v460 = vmul.f32 %v458, 1.442695
        %v461 = vpow.pop %v460
        %v462 = vmul.f32 %v459, 1.442695
        %v463 = vpow.pop %v462
        %v464 = vmul.f32 %v449, %v461
        %v465 = vmul.f32 %v450, %v463
        %s466 = scalar_lea.vmem %s189, 120 [#allocation2]
        %v467 = vld [vmem:[%s466] sm:$0xf]
        %v468 = vld [vmem:[%s466 + $0x4] sm:$0xf]
        %v469 = vunpack.c.l.bf16 %v467
        %v470 = vunpack.c.l.bf16 %v468
        %v471 = vmul.f32 %v464, %v469
        %v472 = vmul.f32 %v465, %v470
        %v473 = vadd.f32 %v427, %v471
        %v474 = vadd.f32 %v428, %v472
        %s475 = scalar_lea.vmem %s189, 128 [#allocation2]
        %v476 = vld [vmem:[%s475] sm:$0xf]
        %v477 = vld [vmem:[%s475 + $0x4] sm:$0xf]
        %v478 = vunpack.c.l.bf16 %v476
        %v479 = vunpack.c.l.bf16 %v477
        %v480 = vmul.f32 %v464, %v478
        %v481 = vmul.f32 %v465, %v479
        %v482 = vadd.f32 %v436, %v480
        %v483 = vadd.f32 %v437, %v481
        %s484 = scalar_lea.vmem %s189, 136 [#allocation2]
        %v485 = vld [vmem:[%s484] sm:$0xf]
        %v486 = vld [vmem:[%s484 + $0x4] sm:$0xf]
        %v487 = vunpack.c.l.bf16 %v485
        %v488 = vunpack.c.l.bf16 %v486
        %v489 = vmul.f32 %v464, %v487
        %v490 = vmul.f32 %v465, %v488
        %v491 = vadd.f32 %v445, %v489
        %v492 = vadd.f32 %v446, %v490
        %v493 = vsub.f32 1.0, %v461
        %v494 = vsub.f32 1.0, %v463
        %v495 = vmul.f32 %v449, %v493
        %v496 = vmul.f32 %v450, %v494
        %s497 = scalar_lea.vmem %s198, 96 [#allocation5]
        %v498 = vld [vmem:[%s497] sm:$0xff]
        %v499 = vld [vmem:[%s497 + $0x8] sm:$0xff]
        %v500 = vmax.f32 %v498, 0.0
        %v501 = vmax.f32 %v499, 0.0
        %v502 = vsub.f32 0.0, %v500
        %v503 = vsub.f32 0.0, %v501
        %v504 = vmul.f32 %v502, 10000.0
        %v505 = vmul.f32 %v503, 10000.0
        %v506 = vmul.f32 %v504, 1.442695
        %v507 = vpow.pop %v506
        %v508 = vmul.f32 %v505, 1.442695
        %v509 = vpow.pop %v508
        %v510 = vmul.f32 %v495, %v507
        %v511 = vmul.f32 %v496, %v509
        %s512 = scalar_lea.vmem %s189, 144 [#allocation2]
        %v513 = vld [vmem:[%s512] sm:$0xf]
        %v514 = vld [vmem:[%s512 + $0x4] sm:$0xf]
        %v515 = vunpack.c.l.bf16 %v513
        %v516 = vunpack.c.l.bf16 %v514
        %v517 = vmul.f32 %v510, %v515
        %v518 = vmul.f32 %v511, %v516
        %v519 = vadd.f32 %v473, %v517
        %v520 = vadd.f32 %v474, %v518
        %s521 = scalar_lea.vmem %s189, 152 [#allocation2]
        %v522 = vld [vmem:[%s521] sm:$0xf]
        %v523 = vld [vmem:[%s521 + $0x4] sm:$0xf]
        %v524 = vunpack.c.l.bf16 %v522
        %v525 = vunpack.c.l.bf16 %v523
        %v526 = vmul.f32 %v510, %v524
        %v527 = vmul.f32 %v511, %v525
        %v528 = vadd.f32 %v482, %v526
        %v529 = vadd.f32 %v483, %v527
        %s530 = scalar_lea.vmem %s189, 160 [#allocation2]
        %v531 = vld [vmem:[%s530] sm:$0xf]
        %v532 = vld [vmem:[%s530 + $0x4] sm:$0xf]
        %v533 = vunpack.c.l.bf16 %v531
        %v534 = vunpack.c.l.bf16 %v532
        %v535 = vmul.f32 %v510, %v533
        %v536 = vmul.f32 %v511, %v534
        %v537 = vadd.f32 %v491, %v535
        %v538 = vadd.f32 %v492, %v536
        %v539 = vsub.f32 1.0, %v507
        %v540 = vsub.f32 1.0, %v509
        %v541 = vmul.f32 %v495, %v539
        %v542 = vmul.f32 %v496, %v540
        %s543 = scalar_lea.vmem %s198, 112 [#allocation5]
        %v544 = vld [vmem:[%s543] sm:$0xff]
        %v545 = vld [vmem:[%s543 + $0x8] sm:$0xff]
        %v546 = vmax.f32 %v544, 0.0
        %v547 = vmax.f32 %v545, 0.0
        %v548 = vsub.f32 0.0, %v546
        %v549 = vsub.f32 0.0, %v547
        %v550 = vmul.f32 %v548, 10000.0
        %v551 = vmul.f32 %v549, 10000.0
        %v552 = vmul.f32 %v550, 1.442695
        %v553 = vpow.pop %v552
        %v554 = vmul.f32 %v551, 1.442695
        %v555 = vpow.pop %v554
        %v556 = vmul.f32 %v541, %v553
        %v557 = vmul.f32 %v542, %v555
        %s558 = scalar_lea.vmem %s189, 168 [#allocation2]
        %v559 = vld [vmem:[%s558] sm:$0xf]
        %v560 = vld [vmem:[%s558 + $0x4] sm:$0xf]
        %v561 = vunpack.c.l.bf16 %v559
        %v562 = vunpack.c.l.bf16 %v560
        %v563 = vmul.f32 %v556, %v561
        %v564 = vmul.f32 %v557, %v562
        %v565 = vadd.f32 %v519, %v563
        %v566 = vadd.f32 %v520, %v564
        %s567 = scalar_lea.vmem %s189, 176 [#allocation2]
        %v568 = vld [vmem:[%s567] sm:$0xf]
        %v569 = vld [vmem:[%s567 + $0x4] sm:$0xf]
        %v570 = vunpack.c.l.bf16 %v568
        %v571 = vunpack.c.l.bf16 %v569
        %v572 = vmul.f32 %v556, %v570
        %v573 = vmul.f32 %v557, %v571
        %v574 = vadd.f32 %v528, %v572
        %v575 = vadd.f32 %v529, %v573
        %s576 = scalar_lea.vmem %s189, 184 [#allocation2]
        %v577 = vld [vmem:[%s576] sm:$0xf]
        %v578 = vld [vmem:[%s576 + $0x4] sm:$0xf]
        %v579 = vunpack.c.l.bf16 %v577
        %v580 = vunpack.c.l.bf16 %v578
        %v581 = vmul.f32 %v556, %v579
        %v582 = vmul.f32 %v557, %v580
        %v583 = vadd.f32 %v537, %v581
        %v584 = vadd.f32 %v538, %v582
        %v585 = vsub.f32 1.0, %v553
        %v586 = vsub.f32 1.0, %v555
        %v587 = vmul.f32 %v541, %v585
        %v588 = vmul.f32 %v542, %v586
        %589 = vst [vmem:[%s223] sm:$0xff] %v565
        %590 = vst [vmem:[%s223 + $0x8] sm:$0xff] %v566
        %s591 = scalar_lea.vmem %s223, 16 [#allocation7]
        %592 = vst [vmem:[%s591] sm:$0xff] %v574
        %593 = vst [vmem:[%s591 + $0x8] sm:$0xff] %v575
        %s594 = scalar_lea.vmem %s223, 32 [#allocation7]
        %595 = vst [vmem:[%s594] sm:$0xff] %v583
        %596 = vst [vmem:[%s594 + $0x8] sm:$0xff] %v584
        %v597 = vsub.f32 1.0, %v587
        %v598 = vsub.f32 1.0, %v588
        %s599 = scalar_lea.vmem %s223, 48 [#allocation7]
        %600 = vst [vmem:[%s599] sm:$0xff] %v597
        %601 = vst [vmem:[%s599 + $0x8] sm:$0xff] %v598
        %s602 = sand.u32 %s100, 1
        %s603 = scalar_lea.sflag [#allocation4], %s602
        %s604 = sand.u32 %s100, 1
        %s605 = smul.addr %s604, 64
        %s606 = scalar_lea.vmem [#allocation7], %s605
        // Predicated region
        $region37: #{tpu_custom_call.1} parent=27 // pred_check
          %p607 = pneg %p110
        $region38: #{tpu_custom_call.1} parent=27 // pred_check_branch
          %609 = sbr.rel (%p607) target = $region40
        $region39: #{tpu_custom_call.1} parent=27 // pred_region
          %s610 = smul.u32 2, %s27
          %s612 = ssub.s32 1024, 1024
          %613 = vsyncadd %s603, %s612
          %s614 = smul.addr %s26, 8
          %s615 = sadd.s32 %s610, %s614
          %s616 = smul.addr %s615, 128
          %s617 = scalar_lea.hbm %s2, %s616
          %s618 = sshll.u32 %s606, 4
          %s619 = int_to_ptr.vmem [resolvable:$true] %s618
          %624 = dma.vmem_to_hbm [thread:$0]  %s619, 1024, %s617, %s603, 128, 128, 8
        $region40: #{tpu_custom_call.1} parent=27 // pred_fallthru
          _
      $region28: #{tpu_custom_call.1} parent=5 // pred_fallthru
        _
      %p625 = scmp.le.s32.totalorder 2, %s17
      // Predicated region
      $region41: #{tpu_custom_call.1} parent=5 // pred_check
        %p626 = pneg %p625
      $region42: #{tpu_custom_call.1} parent=5 // pred_check_branch
        %628 = sbr.rel (%p626) target = $region44
      $region43: #{tpu_custom_call.1} parent=5 // pred_region
        %s629 = ssub.s32 %s17, 2
        // Predicated region
        $region45: #{tpu_custom_call.1} parent=43 // pred_check
          %p630 = pneg %p116
        $region46: #{tpu_custom_call.1} parent=43 // pred_check_branch
          %632 = sbr.rel (%p630) target = $region48
        $region47: #{tpu_custom_call.1} parent=43 // pred_region
          %s633 = sand.u32 %s101, 1
          %s634 = scalar_lea.sflag [#allocation4], %s633
          %s635 = sand.u32 %s101, 1
          %s636 = smul.addr %s635, 64
          %s637 = scalar_lea.vmem [#allocation7], %s636
          %638 = dma.done %s634, 1024
        $region48: #{tpu_custom_call.1} parent=43 // pred_fallthru
          _
      $region44: #{tpu_custom_call.1} parent=5 // pred_fallthru
        _
    $region6: #{tpu_custom_call.1} parent=1 // loop_footer
      %s21 = sadd.s32 1, %s17
    $region7: #{tpu_custom_call.1} parent=1 // loop_footer_branch
      %16 = sbr.rel target = $region3
    $region8: #{tpu_custom_call.1} parent=1 // loop_exit
      _
    %639 = vsyncpa [#allocation3], 1
    %s640 = scalar_lea.sflag [#allocation3], 1
    %641 = vsyncpa %s640, 1
    %642 = vsyncpa [#allocation6], 1
    %s643 = scalar_lea.sflag [#allocation6], 1
    %644 = vsyncpa %s643, 1
    %645 = vsyncpa [#allocation4], 1
    %s646 = scalar_lea.sflag [#allocation4], 1
    %647 = vsyncpa %s646, 1

</llo_original>
